<compile_context>
chip_gen: v7x
topology: tpu7x:2x2x1
jax: 0.10.0
libtpu: 0.0.40
codegen_flags: <defaults>
</compile_context>

<pallas_src>
import jax
import jax.numpy as jnp
from jax.experimental import pallas as pl
from jax.experimental.pallas import tpu as pltpu

IN_DIM = 784
HIDDEN = 256
OUT_DIM = 10

OUT_PAD = 128        # lane-dense output slab
TB_DEFAULT = 512     # batch tile (rows per grid step)

NEG_BIG = -1e30      # mask for padded output logits (kept in f32, underflows in exp)


def _round_up(n, m):
    return ((n + m - 1) // m) * m


def _choose_tb(batch, tb_target):
    """Pick a batch tile (multiple of 8) and the padded batch size."""
    b8 = _round_up(max(batch, 8), 8)
    tb = _round_up(min(tb_target, b8), 8)
    # v7x has 2 TensorCores: keep grid length >= 2 when possible so
    # dimension_semantics=("parallel",) can shard the batch grid across them.
    if b8 // tb < 2 and b8 >= 16:
        tb = _round_up(pl.cdiv(b8, 2), 8)
    return tb, _round_up(b8, tb)


def prepare_params(w1_t, b1, w2_t, b2):
    """One-time pad/cast of the weights (hoisted out of the per-call path).

    w1_t: (784, 256), b1: (256,) or (1, 256), w2_t: (256, 10), b2: (10,) or (1, 10).
    Weights are stored transposed vs. PyTorch nn.Linear so the forward is
    softmax(sigmoid(x @ W1 + b1) @ W2 + b2, axis=-1).
    """
    w1_p = w1_t.astype(jnp.bfloat16)                                    # (784, 256)
    b1_p = jnp.reshape(b1, (1, HIDDEN)).astype(jnp.float32)             # (1, 256)
    w2_p = jnp.pad(w2_t.astype(jnp.bfloat16),
                   ((0, 0), (0, OUT_PAD - OUT_DIM)))                    # (256, 128)
    # Padded logit lanes carry -1e30 in f32 so exp() underflows to 0 and they
    # get zero softmax weight.  Do NOT cast b2_p to bf16.
    b2_p = jnp.pad(jnp.reshape(b2, (1, OUT_DIM)).astype(jnp.float32),
                   ((0, 0), (0, OUT_PAD - OUT_DIM)),
                   constant_values=NEG_BIG)                             # (1, 128)
    return w1_p, b1_p, w2_p, b2_p


def number_network_kernel(x_ref, w1_ref, b1_ref, w2_ref, b2_ref, o_ref):
    # Hidden layer: (TB, 784) @ (784, 256) on the MXU (bf16 in, f32 acc).
    xb = x_ref[...].astype(jnp.bfloat16)
    h = jnp.dot(xb, w1_ref[...], preferred_element_type=jnp.float32)
    h = h + b1_ref[...]
    # sigmoid(h) == 0.5 * (tanh(h/2) + 1): single EUP op, no exp overflow.
    h = 0.5 * (jnp.tanh(0.5 * h) + 1.0)

    # Output layer: (TB, 256) @ (256, 128); padded lanes masked via b2 = -1e30.
    logits = jnp.dot(h.astype(jnp.bfloat16), w2_ref[...],
                     preferred_element_type=jnp.float32)
    logits = logits + b2_ref[...]

    # Numerically stable softmax over the (padded) feature axis.
    m = jnp.max(logits, axis=-1, keepdims=True)
    e = jnp.exp(logits - m)
    denom = jnp.sum(e, axis=-1, keepdims=True)
    o_ref[...] = (e * pl.reciprocal(denom, approx=True)).astype(o_ref.dtype)


def number_network_forward(x, params, *, tb=TB_DEFAULT):
    """x: (B, 784) f32 or bf16; params: output of prepare_params()."""
    w1_p, b1_p, w2_p, b2_p = params
    B = x.shape[0]

    TB, B_pad = _choose_tb(B, tb)
    if B_pad != B:
        # Batch-axis-only pad (no feature pad, no dtype cast); ensures the last
        # grid tile never reads out-of-bounds rows.
        x = jnp.pad(x, ((0, B_pad - B), (0, 0)))

    grid = (B_pad // TB,)

    out = pl.pallas_call(
        number_network_kernel,
        out_shape=jax.ShapeDtypeStruct((B_pad, OUT_PAD), jnp.bfloat16),
        grid_spec=pltpu.PrefetchScalarGridSpec(
            num_scalar_prefetch=0,
            grid=grid,
            in_specs=[
                pl.BlockSpec((TB, IN_DIM), lambda i: (i, 0)),       # x: streamed
                pl.BlockSpec((IN_DIM, HIDDEN), lambda i: (0, 0)),   # W1: resident
                pl.BlockSpec((1, HIDDEN), lambda i: (0, 0)),        # b1: resident
                pl.BlockSpec((HIDDEN, OUT_PAD), lambda i: (0, 0)),  # W2: resident
                pl.BlockSpec((1, OUT_PAD), lambda i: (0, 0)),       # b2: resident
            ],
            out_specs=pl.BlockSpec((TB, OUT_PAD), lambda i: (i, 0)),
        ),
        compiler_params=pltpu.CompilerParams(
            dimension_semantics=("parallel",),
        ),
    )(x, w1_p, b1_p, w2_p, b2_p)

    # TODO(synk): downstream consumers could read the padded (B_pad, 128) bf16
    # slab directly to skip this slice pass.
    return out[:B, :OUT_DIM]


def reference_forward(x, w1_t, b1, w2_t, b2):
    h = jax.nn.sigmoid(x @ w1_t + b1)
    return jax.nn.softmax(h @ w2_t + b2, axis=1)


if __name__ == "__main__":
    key = jax.random.PRNGKey(0)
    k_x, k_w1, k_b1, k_w2, k_b2 = jax.random.split(key, 5)

    B = 8  # small demo batch (perf only shows up at B in the thousands)
    x = jax.random.normal(k_x, (B, IN_DIM), dtype=jnp.float32)

    # Deterministic parameter init (Kaiming-uniform-ish scale like nn.Linear).
    lim1 = 1.0 / jnp.sqrt(IN_DIM)
    lim2 = 1.0 / jnp.sqrt(HIDDEN)
    w1_t = jax.random.uniform(k_w1, (IN_DIM, HIDDEN), jnp.float32, -lim1, lim1)
    b1 = jax.random.uniform(k_b1, (1, HIDDEN), jnp.float32, -lim1, lim1)
    w2_t = jax.random.uniform(k_w2, (HIDDEN, OUT_DIM), jnp.float32, -lim2, lim2)
    b2 = jax.random.uniform(k_b2, (1, OUT_DIM), jnp.float32, -lim2, lim2)

    params = prepare_params(w1_t, b1, w2_t, b2)   # one-time pad/cast at init

    out = number_network_forward(x, params)
    out = jax.block_until_ready(out)

    ref = reference_forward(x, w1_t, b1, w2_t, b2)
    assert out.shape == (B, OUT_DIM)
    out_f32 = out.astype(jnp.float32)
    # bf16 matmuls + bf16 output -> loosened tolerance vs. the f32 reference.
    assert jnp.allclose(out_f32, ref, atol=2e-2, rtol=2e-2), (
        jnp.max(jnp.abs(out_f32 - ref)))
    # softmax rows sum to ~1 (bf16 output + approx reciprocal -> looser atol).
    assert jnp.allclose(jnp.sum(out_f32, axis=1), jnp.ones((B,)), atol=1e-2)

    print("KERNEL_OK")
</pallas_src>

<mosaic_0001>
module attributes {stable_mosaic.version = 11 : i64} {
  func.func @number_network_kernel(%arg0: i32, %arg1: memref<8x784xf32, #tpu.memory_space<vmem>>, %arg2: memref<784x256xbf16, #tpu.memory_space<vmem>>, %arg3: memref<1x256xf32, #tpu.memory_space<vmem>>, %arg4: memref<256x128xbf16, #tpu.memory_space<vmem>>, %arg5: memref<1x128xf32, #tpu.memory_space<vmem>>, %arg6: memref<8x128xbf16, #tpu.memory_space<vmem>>) attributes {dimension_semantics = [#tpu.dimension_semantics<parallel>], iteration_bounds = array<i64: 1>, scalar_prefetch = 0 : i64, scratch_operands = 0 : i64, tpu.core_type = #tpu.core_type<tc>, window_params = [{transform_indices = @transform_0, window_bounds = array<i64: 8, 784>}, {pipeline_mode = #tpu.pipeline_mode<synchronous>, transform_indices = @transform_1, window_bounds = array<i64: 784, 256>}, {pipeline_mode = #tpu.pipeline_mode<synchronous>, transform_indices = @transform_2, window_bounds = array<i64: 1, 256>}, {pipeline_mode = #tpu.pipeline_mode<synchronous>, transform_indices = @transform_3, window_bounds = array<i64: 256, 128>}, {pipeline_mode = #tpu.pipeline_mode<synchronous>, transform_indices = @transform_4, window_bounds = array<i64: 1, 128>}, {transform_indices = @transform_5, window_bounds = array<i64: 8, 128>}]} {
    %c0 = arith.constant 0 : index
    %c0_0 = arith.constant 0 : index
    %0 = vector.load %arg1[%c0, %c0_0] : memref<8x784xf32, #tpu.memory_space<vmem>>, vector<8x784xf32>
    %1 = arith.truncf %0 : vector<8x784xf32> to vector<8x784xbf16>
    %c0_1 = arith.constant 0 : index
    %c0_2 = arith.constant 0 : index
    %2 = vector.load %arg2[%c0_1, %c0_2] : memref<784x256xbf16, #tpu.memory_space<vmem>>, vector<784x256xbf16>
    %cst = arith.constant dense<0.000000e+00> : vector<8x256xf32>
    %3 = tpu.matmul %1, %2, %cst {dimension_numbers = #tpu.dot_dimension_numbers<[1], [0], [0], [1], [0, 0, 1, 1], [], []>} : vector<8x784xbf16>, vector<784x256xbf16>, vector<8x256xf32> -> vector<8x256xf32>
    %c0_3 = arith.constant 0 : index
    %c0_4 = arith.constant 0 : index
    %4 = vector.load %arg3[%c0_3, %c0_4] : memref<1x256xf32, #tpu.memory_space<vmem>>, vector<1x256xf32>
    %5 = vector.broadcast %4 : vector<1x256xf32> to vector<8x256xf32>
    %6 = arith.addf %3, %5 : vector<8x256xf32>
    %cst_5 = arith.constant 5.000000e-01 : f32
    %7 = vector.broadcast %cst_5 : f32 to vector<8x256xf32>
    %8 = arith.mulf %7, %6 : vector<8x256xf32>
    %9 = math.tanh %8 : vector<8x256xf32>
    %cst_6 = arith.constant 1.000000e+00 : f32
    %10 = vector.broadcast %cst_6 : f32 to vector<8x256xf32>
    %11 = arith.addf %9, %10 : vector<8x256xf32>
    %cst_7 = arith.constant 5.000000e-01 : f32
    %12 = vector.broadcast %cst_7 : f32 to vector<8x256xf32>
    %13 = arith.mulf %12, %11 : vector<8x256xf32>
    %14 = arith.truncf %13 : vector<8x256xf32> to vector<8x256xbf16>
    %c0_8 = arith.constant 0 : index
    %c0_9 = arith.constant 0 : index
    %15 = vector.load %arg4[%c0_8, %c0_9] : memref<256x128xbf16, #tpu.memory_space<vmem>>, vector<256x128xbf16>
    %cst_10 = arith.constant dense<0.000000e+00> : vector<8x128xf32>
    %16 = tpu.matmul %14, %15, %cst_10 {dimension_numbers = #tpu.dot_dimension_numbers<[1], [0], [0], [1], [0, 0, 1, 1], [], []>} : vector<8x256xbf16>, vector<256x128xbf16>, vector<8x128xf32> -> vector<8x128xf32>
    %c0_11 = arith.constant 0 : index
    %c0_12 = arith.constant 0 : index
    %17 = vector.load %arg5[%c0_11, %c0_12] : memref<1x128xf32, #tpu.memory_space<vmem>>, vector<1x128xf32>
    %18 = vector.broadcast %17 : vector<1x128xf32> to vector<8x128xf32>
    %19 = arith.addf %16, %18 : vector<8x128xf32>
    %cst_13 = arith.constant dense<0xFF800000> : vector<8xf32>
    %20 = vector.multi_reduction <maximumf>, %19, %cst_13 [1] : vector<8x128xf32> to vector<8xf32>
    %21 = vector.shape_cast %20 : vector<8xf32> to vector<8x1xf32>
    %22 = vector.broadcast %21 : vector<8x1xf32> to vector<8x128xf32>
    %23 = arith.subf %19, %22 : vector<8x128xf32>
    %24 = math.exp %23 : vector<8x128xf32>
    %cst_14 = arith.constant dense<0.000000e+00> : vector<8xf32>
    %25 = vector.multi_reduction <add>, %24, %cst_14 [1] : vector<8x128xf32> to vector<8xf32>
    %26 = vector.shape_cast %25 : vector<8xf32> to vector<8x1xf32>
    %27 = tpu.reciprocal %26 {approx = true} : vector<8x1xf32> -> vector<8x1xf32>
    %28 = vector.broadcast %27 : vector<8x1xf32> to vector<8x128xf32>
    %29 = arith.mulf %24, %28 : vector<8x128xf32>
    %30 = arith.truncf %29 : vector<8x128xf32> to vector<8x128xbf16>
    %c0_15 = arith.constant 0 : index
    %c0_16 = arith.constant 0 : index
    %31 = vector.load %arg6[%c0_15, %c0_16] : memref<8x128xbf16, #tpu.memory_space<vmem>>, vector<8x128xbf16>
    tpu.vector_store %arg6[%c0_15, %c0_16], %30 {strides = array<i32>} : memref<8x128xbf16, #tpu.memory_space<vmem>>, vector<8x128xbf16>,
    return
  }
  func.func @transform_0(%arg0: i32) -> (i32, i32) {
    %c0_i32 = arith.constant 0 : i32
    %c0_i32_0 = arith.constant 0 : i32
    return %arg0, %c0_i32 : i32, i32
  }
  func.func @transform_1(%arg0: i32) -> (i32, i32) {
    %c0_i32 = arith.constant 0 : i32
    %c0_i32_0 = arith.constant 0 : i32
    %c0_i32_1 = arith.constant 0 : i32
    return %c0_i32, %c0_i32_0 : i32, i32
  }
  func.func @transform_2(%arg0: i32) -> (i32, i32) {
    %c0_i32 = arith.constant 0 : i32
    %c0_i32_0 = arith.constant 0 : i32
    %c0_i32_1 = arith.constant 0 : i32
    return %c0_i32, %c0_i32_0 : i32, i32
  }
  func.func @transform_3(%arg0: i32) -> (i32, i32) {
    %c0_i32 = arith.constant 0 : i32
    %c0_i32_0 = arith.constant 0 : i32
    %c0_i32_1 = arith.constant 0 : i32
    return %c0_i32, %c0_i32_0 : i32, i32
  }
  func.func @transform_4(%arg0: i32) -> (i32, i32) {
    %c0_i32 = arith.constant 0 : i32
    %c0_i32_0 = arith.constant 0 : i32
    %c0_i32_1 = arith.constant 0 : i32
    return %c0_i32, %c0_i32_0 : i32, i32
  }
  func.func @transform_5(%arg0: i32) -> (i32, i32) {
    %c0_i32 = arith.constant 0 : i32
    %c0_i32_0 = arith.constant 0 : i32
    return %arg0, %c0_i32 : i32, i32
  }
}

</mosaic_0001>

<llo_original>
// kernel: tpu_custom_call.1
$region0: #{tpu_custom_call.1}
  #allocation0 [shape = 'u32[]', space=smem, size = 0x4, offset = 0x4, fixed_abs, tag = 'smem constant byte address 0x4 - core index']
  #allocation1 [shape = 'u32[144,128]{1,0:T(1,128)}', space=vmem, size = 0x12000, scoped, tag = 'internal scratch']
  %s0 = inlined_call_operand.hbm [shape: f32[8,784], index: 0, kind: input, shape index: {}]
  %s1 = inlined_call_operand.hbm [shape: bf16[784,256], index: 1, kind: input, shape index: {}]
  %s2 = inlined_call_operand.vmem [shape: f32[1,256], index: 2, kind: input, shape index: {}]
  %s3 = inlined_call_operand.hbm [shape: bf16[256,128], index: 3, kind: input, shape index: {}]
  %s4 = inlined_call_operand.vmem [shape: f32[1,128], index: 4, kind: input, shape index: {}]
  %s5 = inlined_call_operand.hbm [shape: bf16[8,128], index: 5, kind: output, shape index: {}]
  %s6 = sld [smem:[#allocation0]]
  $region42: #{tpu_custom_call.1} parent=0
    _
  %s8 = ssub.s32 1, %s6
  %s9 = scalar_select 0, %s8, %s6
  $region1: #{tpu_custom_call.1} parent=0
    #allocation2 [shape = 'u8[28672]{0}', space=vmem, size = 0x7000, scoped, tag = 'input window, operand 0, single buffered']
    #allocation3 [shape = 's32[1]{0}', space=sflag, size = 0x4, scoped, tag = 'scoped memory for tpu_custom_call.1']
    #allocation4 [shape = 's32[1]{0}', space=sflag, size = 0x4, scoped, tag = 'scoped memory for tpu_custom_call.1']
    #allocation5 [shape = 'u8[401408]{0}', space=vmem, size = 0x62000, scoped, tag = 'input window, operand 1, single buffered']
    #allocation6 [shape = 's32[1]{0}', space=sflag, size = 0x4, scoped, tag = 'scoped memory for tpu_custom_call.1']
    #allocation7 [shape = 'u8[65536]{0}', space=vmem, size = 0x10000, scoped, tag = 'input window, operand 3, single buffered']
    #allocation8 [shape = 'u8[2048]{0}', space=vmem, size = 0x800, scoped, tag = 'output window, operand 0, single buffered']
    %10 = vsyncpa [#allocation3], 0
    %11 = vsyncpa [#allocation6], 0
    %12 = vsyncpa [#allocation4], 0
    // Predicated region
    $region2: #{tpu_custom_call.1} parent=1 // pred_check
      _
    $region3: #{tpu_custom_call.1} parent=1 // pred_check_branch
      %14 = sbr.rel (0) target = $region5
    $region4: #{tpu_custom_call.1} parent=1 // pred_region
      %s16 = ssub.s32 896, 896
      %17 = vsyncadd [#allocation3], %s16
      %s19 = sshll.u32 [#allocation2], 4
      %s20 = int_to_ptr.vmem [resolvable:$true] %s19
      %22 = dma.hbm_to_vmem [thread:$0]  %s0, 896, %s20, [#allocation3]
    $region5: #{tpu_custom_call.1} parent=1 // pred_fallthru
      _
    // Predicated region
    $region6: #{tpu_custom_call.1} parent=1 // pred_check
      _
    $region7: #{tpu_custom_call.1} parent=1 // pred_check_branch
      %24 = sbr.rel (0) target = $region9
    $region8: #{tpu_custom_call.1} parent=1 // pred_region
      %s26 = ssub.s32 12544, 12544
      %27 = vsyncadd [#allocation6], %s26
      %s28 = sshll.u32 [#allocation5], 4
      %s29 = int_to_ptr.vmem [resolvable:$true] %s28
      %34 = dma.hbm_to_vmem [thread:$0]  %s1, 12544, %s29, [#allocation6], 128, 128, 8
    $region9: #{tpu_custom_call.1} parent=1 // pred_fallthru
      _
    // Predicated region
    $region10: #{tpu_custom_call.1} parent=1 // pred_check
      _
    $region11: #{tpu_custom_call.1} parent=1 // pred_check_branch
      %36 = sbr.rel (0) target = $region13
    $region12: #{tpu_custom_call.1} parent=1 // pred_region
      _
    $region13: #{tpu_custom_call.1} parent=1 // pred_fallthru
      _
    // Predicated region
    $region14: #{tpu_custom_call.1} parent=1 // pred_check
      _
    $region15: #{tpu_custom_call.1} parent=1 // pred_check_branch
      %38 = sbr.rel (0) target = $region17
    $region16: #{tpu_custom_call.1} parent=1 // pred_region
      %s40 = ssub.s32 2048, 2048
      %41 = vsyncadd [#allocation6], %s40
      %s42 = sshll.u32 [#allocation7], 4
      %s43 = int_to_ptr.vmem [resolvable:$true] %s42
      %48 = dma.hbm_to_vmem [thread:$0]  %s3, 2048, %s43, [#allocation6], 64, 64, 4
    $region17: #{tpu_custom_call.1} parent=1 // pred_fallthru
      _
    // Predicated region
    $region18: #{tpu_custom_call.1} parent=1 // pred_check
      _
    $region19: #{tpu_custom_call.1} parent=1 // pred_check_branch
      %50 = sbr.rel (0) target = $region21
    $region20: #{tpu_custom_call.1} parent=1 // pred_region
      _
    $region21: #{tpu_custom_call.1} parent=1 // pred_fallthru
      _
    // Predicated region
    $region22: #{tpu_custom_call.1} parent=1 // pred_check
      _
    $region23: #{tpu_custom_call.1} parent=1 // pred_check_branch
      %52 = sbr.rel (0) target = $region25
    $region24: #{tpu_custom_call.1} parent=1 // pred_region
      %53 = dma.done [#allocation3], 896
    $region25: #{tpu_custom_call.1} parent=1 // pred_fallthru
      _
    // Predicated region
    $region26: #{tpu_custom_call.1} parent=1 // pred_check
      _
    $region27: #{tpu_custom_call.1} parent=1 // pred_check_branch
      %55 = sbr.rel (0) target = $region29
    $region28: #{tpu_custom_call.1} parent=1 // pred_region
      %56 = dma.done [#allocation6], 12544
    $region29: #{tpu_custom_call.1} parent=1 // pred_fallthru
      _
    // Predicated region
    $region30: #{tpu_custom_call.1} parent=1 // pred_check
      _
    $region31: #{tpu_custom_call.1} parent=1 // pred_check_branch
      %58 = sbr.rel (0) target = $region33
    $region32: #{tpu_custom_call.1} parent=1 // pred_region
      %59 = dma.done [#allocation6], 2048
    $region33: #{tpu_custom_call.1} parent=1 // pred_fallthru
      _
    %v61 = vld [vmem:[#allocation2] sm:$0xff]
    %v62 = vld [vmem:[#allocation2 + $0x8] sm:$0xff]
    %v63 = vld [vmem:[#allocation2 + $0x10] sm:$0xff]
    %v64 = vld [vmem:[#allocation2 + $0x18] sm:$0xff]
    %v65 = vld [vmem:[#allocation2 + $0x20] sm:$0xff]
    %v66 = vld [vmem:[#allocation2 + $0x28] sm:$0xff]
    %v67 = vld [vmem:[#allocation2 + $0x30] sm:$0xff]
    %v68 = vpack.c.bf16 %v61, %v61
    %v69 = vpack.c.bf16 %v62, %v62
    %v70 = vpack.c.bf16 %v63, %v63
    %v71 = vpack.c.bf16 %v64, %v64
    %v72 = vpack.c.bf16 %v65, %v65
    %v73 = vpack.c.bf16 %v66, %v66
    %v74 = vpack.c.bf16 %v67, %v67
    %v75 = vld [vmem:[#allocation5] sm:$0xff]
    %v76 = vld [vmem:[#allocation5 + $0x8] sm:$0xff]
    %v77 = vld [vmem:[#allocation5 + $0x10] sm:$0xff]
    %v78 = vld [vmem:[#allocation5 + $0x18] sm:$0xff]
    %v79 = vld [vmem:[#allocation5 + $0x20] sm:$0xff]
    %v80 = vld [vmem:[#allocation5 + $0x28] sm:$0xff]
    %v81 = vld [vmem:[#allocation5 + $0x30] sm:$0xff]
    %v82 = vld [vmem:[#allocation5 + $0x38] sm:$0xff]
    %v83 = vld [vmem:[#allocation5 + $0x40] sm:$0xff]
    %v84 = vld [vmem:[#allocation5 + $0x48] sm:$0xff]
    %v85 = vld [vmem:[#allocation5 + $0x50] sm:$0xff]
    %v86 = vld [vmem:[#allocation5 + $0x58] sm:$0xff]
    %v87 = vld [vmem:[#allocation5 + $0x60] sm:$0xff]
    %v88 = vld [vmem:[#allocation5 + $0x68] sm:$0xff]
    %v89 = vld [vmem:[#allocation5 + $0x70] sm:$0xff]
    %v90 = vld [vmem:[#allocation5 + $0x78] sm:$0xff]
    %v91 = vld [vmem:[#allocation5 + $0x80] sm:$0xff]
    %v92 = vld [vmem:[#allocation5 + $0x88] sm:$0xff]
    %v93 = vld [vmem:[#allocation5 + $0x90] sm:$0xff]
    %v94 = vld [vmem:[#allocation5 + $0x98] sm:$0xff]
    %v95 = vld [vmem:[#allocation5 + $0xa0] sm:$0xff]
    %v96 = vld [vmem:[#allocation5 + $0xa8] sm:$0xff]
    %v97 = vld [vmem:[#allocation5 + $0xb0] sm:$0xff]
    %v98 = vld [vmem:[#allocation5 + $0xb8] sm:$0xff]
    %v99 = vld [vmem:[#allocation5 + $0xc0] sm:$0xff]
    %v100 = vld [vmem:[#allocation5 + $0xc8] sm:$0xff]
    %v101 = vld [vmem:[#allocation5 + $0xd0] sm:$0xff]
    %v102 = vld [vmem:[#allocation5 + $0xd8] sm:$0xff]
    %v103 = vld [vmem:[#allocation5 + $0xe0] sm:$0xff]
    %v104 = vld [vmem:[#allocation5 + $0xe8] sm:$0xff]
    %v105 = vld [vmem:[#allocation5 + $0xf0] sm:$0xff]
    %v106 = vld [vmem:[#allocation5 + $0xf8] sm:$0xff]
    %v107 = vld [vmem:[#allocation5 + $0x100] sm:$0xff]
    %v108 = vld [vmem:[#allocation5 + $0x108] sm:$0xff]
    %v109 = vld [vmem:[#allocation5 + $0x110] sm:$0xff]
    %v110 = vld [vmem:[#allocation5 + $0x118] sm:$0xff]
    %v111 = vld [vmem:[#allocation5 + $0x120] sm:$0xff]
    %v112 = vld [vmem:[#allocation5 + $0x128] sm:$0xff]
    %v113 = vld [vmem:[#allocation5 + $0x130] sm:$0xff]
    %v114 = vld [vmem:[#allocation5 + $0x138] sm:$0xff]
    %v115 = vld [vmem:[#allocation5 + $0x140] sm:$0xff]
    %v116 = vld [vmem:[#allocation5 + $0x148] sm:$0xff]
    %v117 = vld [vmem:[#allocation5 + $0x150] sm:$0xff]
    %v118 = vld [vmem:[#allocation5 + $0x158] sm:$0xff]
    %v119 = vld [vmem:[#allocation5 + $0x160] sm:$0xff]
    %v120 = vld [vmem:[#allocation5 + $0x168] sm:$0xff]
    %v121 = vld [vmem:[#allocation5 + $0x170] sm:$0xff]
    %v122 = vld [vmem:[#allocation5 + $0x178] sm:$0xff]
    %v123 = vld [vmem:[#allocation5 + $0x180] sm:$0xff]
    %v124 = vld [vmem:[#allocation5 + $0x188] sm:$0xff]
    %v125 = vld [vmem:[#allocation5 + $0x190] sm:$0xff]
    %v126 = vld [vmem:[#allocation5 + $0x198] sm:$0xff]
    %v127 = vld [vmem:[#allocation5 + $0x1a0] sm:$0xff]
    %v128 = vld [vmem:[#allocation5 + $0x1a8] sm:$0xff]
    %v129 = vld [vmem:[#allocation5 + $0x1b0] sm:$0xff]
    %v130 = vld [vmem:[#allocation5 + $0x1b8] sm:$0xff]
    %v131 = vld [vmem:[#allocation5 + $0x1c0] sm:$0xff]
    %v132 = vld [vmem:[#allocation5 + $0x1c8] sm:$0xff]
    %v133 = vld [vmem:[#allocation5 + $0x1d0] sm:$0xff]
    %v134 = vld [vmem:[#allocation5 + $0x1d8] sm:$0xff]
    %v135 = vld [vmem:[#allocation5 + $0x1e0] sm:$0xff]
    %v136 = vld [vmem:[#allocation5 + $0x1e8] sm:$0xff]
    %v137 = vld [vmem:[#allocation5 + $0x1f0] sm:$0xff]
    %v138 = vld [vmem:[#allocation5 + $0x1f8] sm:$0xff]
    %v139 = vld [vmem:[#allocation5 + $0x200] sm:$0xff]
    %v140 = vld [vmem:[#allocation5 + $0x208] sm:$0xff]
    %v141 = vld [vmem:[#allocation5 + $0x210] sm:$0xff]
    %v142 = vld [vmem:[#allocation5 + $0x218] sm:$0xff]
    %v143 = vld [vmem:[#allocation5 + $0x220] sm:$0xff]
    %v144 = vld [vmem:[#allocation5 + $0x228] sm:$0xff]
    %v145 = vld [vmem:[#allocation5 + $0x230] sm:$0xff]
    %v146 = vld [vmem:[#allocation5 + $0x238] sm:$0xff]
    %v147 = vld [vmem:[#allocation5 + $0x240] sm:$0xff]
    %v148 = vld [vmem:[#allocation5 + $0x248] sm:$0xff]
    %v149 = vld [vmem:[#allocation5 + $0x250] sm:$0xff]
    %v150 = vld [vmem:[#allocation5 + $0x258] sm:$0xff]
    %v151 = vld [vmem:[#allocation5 + $0x260] sm:$0xff]
    %v152 = vld [vmem:[#allocation5 + $0x268] sm:$0xff]
    %v153 = vld [vmem:[#allocation5 + $0x270] sm:$0xff]
    %v154 = vld [vmem:[#allocation5 + $0x278] sm:$0xff]
    %v155 = vld [vmem:[#allocation5 + $0x280] sm:$0xff]
    %v156 = vld [vmem:[#allocation5 + $0x288] sm:$0xff]
    %v157 = vld [vmem:[#allocation5 + $0x290] sm:$0xff]
    %v158 = vld [vmem:[#allocation5 + $0x298] sm:$0xff]
    %v159 = vld [vmem:[#allocation5 + $0x2a0] sm:$0xff]
    %v160 = vld [vmem:[#allocation5 + $0x2a8] sm:$0xff]
    %v161 = vld [vmem:[#allocation5 + $0x2b0] sm:$0xff]
    %v162 = vld [vmem:[#allocation5 + $0x2b8] sm:$0xff]
    %v163 = vld [vmem:[#allocation5 + $0x2c0] sm:$0xff]
    %v164 = vld [vmem:[#allocation5 + $0x2c8] sm:$0xff]
    %v165 = vld [vmem:[#allocation5 + $0x2d0] sm:$0xff]
    %v166 = vld [vmem:[#allocation5 + $0x2d8] sm:$0xff]
    %v167 = vld [vmem:[#allocation5 + $0x2e0] sm:$0xff]
    %v168 = vld [vmem:[#allocation5 + $0x2e8] sm:$0xff]
    %v169 = vld [vmem:[#allocation5 + $0x2f0] sm:$0xff]
    %v170 = vld [vmem:[#allocation5 + $0x2f8] sm:$0xff]
    %v171 = vld [vmem:[#allocation5 + $0x300] sm:$0xff]
    %v172 = vld [vmem:[#allocation5 + $0x308] sm:$0xff]
    %v173 = vld [vmem:[%s2] sm:$0x3]
    %v175 = vlaneseq
    %v176 = vshrl.u32 %v175, 7
    %v177 = vsub.s32 0, %v176
    %v178 = vrot.slane %v173, %v177
    %v179 = vlaneseq
    %v180 = vshrl.u32 %v179, 7
    %v181 = vsub.s32 1, %v180
    %v182 = vrot.slane %v173, %v181
    %v283 = vunpack.c.l.b16 %v75
    %v284 = vunpack.c.h.b16 %v75
    %v285 = vunpack.c.l.b16 %v76
    %v286 = vunpack.c.h.b16 %v76
    %v287 = vunpack.c.l.b16 %v77
    %v288 = vunpack.c.h.b16 %v77
    %v289 = vunpack.c.l.b16 %v78
    %v290 = vunpack.c.h.b16 %v78
    %v291 = vunpack.c.l.b16 %v79
    %v292 = vunpack.c.h.b16 %v79
    %v293 = vunpack.c.l.b16 %v80
    %v294 = vunpack.c.h.b16 %v80
    %v295 = vunpack.c.l.b16 %v81
    %v296 = vunpack.c.h.b16 %v81
    %v297 = vunpack.c.l.b16 %v82
    %v298 = vunpack.c.h.b16 %v82
    %v299 = vunpack.c.l.b16 %v83
    %v300 = vunpack.c.h.b16 %v83
    %v301 = vunpack.c.l.b16 %v84
    %v302 = vunpack.c.h.b16 %v84
    %v303 = vunpack.c.l.b16 %v85
    %v304 = vunpack.c.h.b16 %v85
    %v305 = vunpack.c.l.b16 %v86
    %v306 = vunpack.c.h.b16 %v86
    %v307 = vunpack.c.l.b16 %v87
    %v308 = vunpack.c.h.b16 %v87
    %v309 = vunpack.c.l.b16 %v88
    %v310 = vunpack.c.h.b16 %v88
    %v311 = vunpack.c.l.b16 %v89
    %v312 = vunpack.c.h.b16 %v89
    %v313 = vunpack.c.l.b16 %v90
    %v314 = vunpack.c.h.b16 %v90
    %v315 = vunpack.c.l.b16 %v91
    %v316 = vunpack.c.h.b16 %v91
    %v317 = vunpack.c.l.b16 %v92
    %v318 = vunpack.c.h.b16 %v92
    %v319 = vunpack.c.l.b16 %v93
    %v320 = vunpack.c.h.b16 %v93
    %v321 = vunpack.c.l.b16 %v94
    %v322 = vunpack.c.h.b16 %v94
    %v323 = vunpack.c.l.b16 %v95
    %v324 = vunpack.c.h.b16 %v95
    %v325 = vunpack.c.l.b16 %v96
    %v326 = vunpack.c.h.b16 %v96
    %v327 = vunpack.c.l.b16 %v97
    %v328 = vunpack.c.h.b16 %v97
    %v329 = vunpack.c.l.b16 %v98
    %v330 = vunpack.c.h.b16 %v98
    %v331 = vunpack.c.l.b16 %v99
    %v332 = vunpack.c.h.b16 %v99
    %v333 = vunpack.c.l.b16 %v100
    %v334 = vunpack.c.h.b16 %v100
    %v335 = vunpack.c.l.b16 %v101
    %v336 = vunpack.c.h.b16 %v101
    %v337 = vunpack.c.l.b16 %v102
    %v338 = vunpack.c.h.b16 %v102
    %v339 = vunpack.c.l.b16 %v103
    %v340 = vunpack.c.h.b16 %v103
    %v341 = vunpack.c.l.b16 %v104
    %v342 = vunpack.c.h.b16 %v104
    %v343 = vunpack.c.l.b16 %v105
    %v344 = vunpack.c.h.b16 %v105
    %v345 = vunpack.c.l.b16 %v106
    %v346 = vunpack.c.h.b16 %v106
    %v347 = vunpack.c.l.b16 %v107
    %v348 = vunpack.c.h.b16 %v107
    %v349 = vunpack.c.l.b16 %v108
    %v350 = vunpack.c.h.b16 %v108
    %v351 = vunpack.c.l.b16 %v109
    %v352 = vunpack.c.h.b16 %v109
    %v353 = vunpack.c.l.b16 %v110
    %v354 = vunpack.c.h.b16 %v110
    %v355 = vunpack.c.l.b16 %v111
    %v356 = vunpack.c.h.b16 %v111
    %v357 = vunpack.c.l.b16 %v112
    %v358 = vunpack.c.h.b16 %v112
    %v359 = vunpack.c.l.b16 %v113
    %v360 = vunpack.c.h.b16 %v113
    %v361 = vunpack.c.l.b16 %v114
    %v362 = vunpack.c.h.b16 %v114
    %v363 = vunpack.c.l.b16 %v115
    %v364 = vunpack.c.h.b16 %v115
    %v365 = vunpack.c.l.b16 %v116
    %v366 = vunpack.c.h.b16 %v116
    %v367 = vunpack.c.l.b16 %v117
    %v368 = vunpack.c.h.b16 %v117
    %v369 = vunpack.c.l.b16 %v118
    %v370 = vunpack.c.h.b16 %v118
    %v371 = vunpack.c.l.b16 %v119
    %v372 = vunpack.c.h.b16 %v119
    %v373 = vunpack.c.l.b16 %v120
    %v374 = vunpack.c.h.b16 %v120
    %v375 = vunpack.c.l.b16 %v121
    %v376 = vunpack.c.h.b16 %v121
    %v377 = vunpack.c.l.b16 %v122
    %v378 = vunpack.c.h.b16 %v122
    %v379 = vunpack.c.l.b16 %v123
    %v380 = vunpack.c.h.b16 %v123
    %v381 = vunpack.c.l.b16 %v124
    %v382 = vunpack.c.h.b16 %v124
    %v383 = vunpack.c.l.b16 %v125
    %v384 = vunpack.c.h.b16 %v125
    %v385 = vunpack.c.l.b16 %v126
    %v386 = vunpack.c.h.b16 %v126
    %v387 = vunpack.c.l.b16 %v127
    %v388 = vunpack.c.h.b16 %v127
    %v389 = vunpack.c.l.b16 %v128
    %v390 = vunpack.c.h.b16 %v128
    %v391 = vunpack.c.l.b16 %v129
    %v392 = vunpack.c.h.b16 %v129
    %v393 = vunpack.c.l.b16 %v130
    %v394 = vunpack.c.h.b16 %v130
    %v395 = vunpack.c.l.b16 %v131
    %v396 = vunpack.c.h.b16 %v131
    %v397 = vunpack.c.l.b16 %v132
    %v398 = vunpack.c.h.b16 %v132
    %v399 = vunpack.c.l.b16 %v133
    %v400 = vunpack.c.h.b16 %v133
    %v401 = vunpack.c.l.b16 %v134
    %v402 = vunpack.c.h.b16 %v134
    %v403 = vunpack.c.l.b16 %v135
    %v404 = vunpack.c.h.b16 %v135
    %v405 = vunpack.c.l.b16 %v136
    %v406 = vunpack.c.h.b16 %v136
    %v407 = vunpack.c.l.b16 %v137
    %v408 = vunpack.c.h.b16 %v137
    %v409 = vunpack.c.l.b16 %v138
    %v410 = vunpack.c.h.b16 %v138
    %v411 = vunpack.c.l.b16 %v139
    %v412 = vunpack.c.h.b16 %v139
    %v413 = vunpack.c.l.b16 %v140
    %v414 = vunpack.c.h.b16 %v140
    %v415 = vunpack.c.l.b16 %v141
    %v416 = vunpack.c.h.b16 %v141
    %v417 = vunpack.c.l.b16 %v142
    %v418 = vunpack.c.h.b16 %v142
    %v419 = vunpack.c.l.b16 %v143
    %v420 = vunpack.c.h.b16 %v143
    %v421 = vunpack.c.l.b16 %v144
    %v422 = vunpack.c.h.b16 %v144
    %v423 = vunpack.c.l.b16 %v145
    %v424 = vunpack.c.h.b16 %v145
    %v425 = vunpack.c.l.b16 %v146
    %v426 = vunpack.c.h.b16 %v146
    %v427 = vunpack.c.l.b16 %v147
    %v428 = vunpack.c.h.b16 %v147
    %v429 = vunpack.c.l.b16 %v148
    %v430 = vunpack.c.h.b16 %v148
    %v431 = vunpack.c.l.b16 %v149
    %v432 = vunpack.c.h.b16 %v149
    %v433 = vunpack.c.l.b16 %v150
    %v434 = vunpack.c.h.b16 %v150
    %v435 = vunpack.c.l.b16 %v151
    %v436 = vunpack.c.h.b16 %v151
    %v437 = vunpack.c.l.b16 %v152
    %v438 = vunpack.c.h.b16 %v152
    %v439 = vunpack.c.l.b16 %v153
    %v440 = vunpack.c.h.b16 %v153
    %v441 = vunpack.c.l.b16 %v154
    %v442 = vunpack.c.h.b16 %v154
    %v443 = vunpack.c.l.b16 %v155
    %v444 = vunpack.c.h.b16 %v155
    %v445 = vunpack.c.l.b16 %v156
    %v446 = vunpack.c.h.b16 %v156
    %v447 = vunpack.c.l.b16 %v157
    %v448 = vunpack.c.h.b16 %v157
    %v449 = vunpack.c.l.b16 %v158
    %v450 = vunpack.c.h.b16 %v158
    %v451 = vunpack.c.l.b16 %v159
    %v452 = vunpack.c.h.b16 %v159
    %v453 = vunpack.c.l.b16 %v160
    %v454 = vunpack.c.h.b16 %v160
    %v455 = vunpack.c.l.b16 %v161
    %v456 = vunpack.c.h.b16 %v161
    %v457 = vunpack.c.l.b16 %v162
    %v458 = vunpack.c.h.b16 %v162
    %v459 = vunpack.c.l.b16 %v163
    %v460 = vunpack.c.h.b16 %v163
    %v461 = vunpack.c.l.b16 %v164
    %v462 = vunpack.c.h.b16 %v164
    %v463 = vunpack.c.l.b16 %v165
    %v464 = vunpack.c.h.b16 %v165
    %v465 = vunpack.c.l.b16 %v166
    %v466 = vunpack.c.h.b16 %v166
    %v467 = vunpack.c.l.b16 %v167
    %v468 = vunpack.c.h.b16 %v167
    %v469 = vunpack.c.l.b16 %v168
    %v470 = vunpack.c.h.b16 %v168
    %v471 = vunpack.c.l.b16 %v169
    %v472 = vunpack.c.h.b16 %v169
    %v473 = vunpack.c.l.b16 %v170
    %v474 = vunpack.c.h.b16 %v170
    %v475 = vunpack.c.l.b16 %v171
    %v476 = vunpack.c.h.b16 %v171
    %v477 = vunpack.c.l.b16 %v172
    %v478 = vunpack.c.h.b16 %v172
    %v479 = vpack.c.b16 %v285, %v283
    %v480 = vpack.c.b16 %v286, %v284
    %v481 = vpack.c.b16 %v289, %v287
    %v482 = vpack.c.b16 %v290, %v288
    %v483 = vpack.c.b16 %v293, %v291
    %v484 = vpack.c.b16 %v294, %v292
    %v485 = vpack.c.b16 %v297, %v295
    %v486 = vpack.c.b16 %v298, %v296
    %v487 = vpack.c.b16 %v301, %v299
    %v488 = vpack.c.b16 %v302, %v300
    %v489 = vpack.c.b16 %v305, %v303
    %v490 = vpack.c.b16 %v306, %v304
    %v491 = vpack.c.b16 %v309, %v307
    %v492 = vpack.c.b16 %v310, %v308
    %v493 = vpack.c.b16 %v313, %v311
    %v494 = vpack.c.b16 %v314, %v312
    %v495 = vpack.c.b16 %v317, %v315
    %v496 = vpack.c.b16 %v318, %v316
    %v497 = vpack.c.b16 %v321, %v319
    %v498 = vpack.c.b16 %v322, %v320
    %v499 = vpack.c.b16 %v325, %v323
    %v500 = vpack.c.b16 %v326, %v324
    %v501 = vpack.c.b16 %v329, %v327
    %v502 = vpack.c.b16 %v330, %v328
    %v503 = vpack.c.b16 %v333, %v331
    %v504 = vpack.c.b16 %v334, %v332
    %v505 = vpack.c.b16 %v337, %v335
    %v506 = vpack.c.b16 %v338, %v336
    %v507 = vpack.c.b16 %v341, %v339
    %v508 = vpack.c.b16 %v342, %v340
    %v509 = vpack.c.b16 %v345, %v343
    %v510 = vpack.c.b16 %v346, %v344
    %v511 = vpack.c.b16 %v349, %v347
    %v512 = vpack.c.b16 %v350, %v348
    %v513 = vpack.c.b16 %v353, %v351
    %v514 = vpack.c.b16 %v354, %v352
    %v515 = vpack.c.b16 %v357, %v355
    %v516 = vpack.c.b16 %v358, %v356
    %v517 = vpack.c.b16 %v361, %v359
    %v518 = vpack.c.b16 %v362, %v360
    %v519 = vpack.c.b16 %v365, %v363
    %v520 = vpack.c.b16 %v366, %v364
    %v521 = vpack.c.b16 %v369, %v367
    %v522 = vpack.c.b16 %v370, %v368
    %v523 = vpack.c.b16 %v373, %v371
    %v524 = vpack.c.b16 %v374, %v372
    %v525 = vpack.c.b16 %v377, %v375
    %v526 = vpack.c.b16 %v378, %v376
    %v527 = vpack.c.b16 %v381, %v379
    %v528 = vpack.c.b16 %v382, %v380
    %v529 = vpack.c.b16 %v385, %v383
    %v530 = vpack.c.b16 %v386, %v384
    %v531 = vpack.c.b16 %v389, %v387
    %v532 = vpack.c.b16 %v390, %v388
    %v533 = vpack.c.b16 %v393, %v391
    %v534 = vpack.c.b16 %v394, %v392
    %v535 = vpack.c.b16 %v397, %v395
    %v536 = vpack.c.b16 %v398, %v396
    %v537 = vpack.c.b16 %v401, %v399
    %v538 = vpack.c.b16 %v402, %v400
    %v539 = vpack.c.b16 %v405, %v403
    %v540 = vpack.c.b16 %v406, %v404
    %v541 = vpack.c.b16 %v409, %v407
    %v542 = vpack.c.b16 %v410, %v408
    %v543 = vpack.c.b16 %v413, %v411
    %v544 = vpack.c.b16 %v414, %v412
    %v545 = vpack.c.b16 %v417, %v415
    %v546 = vpack.c.b16 %v418, %v416
    %v547 = vpack.c.b16 %v421, %v419
    %v548 = vpack.c.b16 %v422, %v420
    %v549 = vpack.c.b16 %v425, %v423
    %v550 = vpack.c.b16 %v426, %v424
    %v551 = vpack.c.b16 %v429, %v427
    %v552 = vpack.c.b16 %v430, %v428
    %v553 = vpack.c.b16 %v433, %v431
    %v554 = vpack.c.b16 %v434, %v432
    %v555 = vpack.c.b16 %v437, %v435
    %v556 = vpack.c.b16 %v438, %v436
    %v557 = vpack.c.b16 %v441, %v439
    %v558 = vpack.c.b16 %v442, %v440
    %v559 = vpack.c.b16 %v445, %v443
    %v560 = vpack.c.b16 %v446, %v444
    %v561 = vpack.c.b16 %v449, %v447
    %v562 = vpack.c.b16 %v450, %v448
    %v563 = vpack.c.b16 %v453, %v451
    %v564 = vpack.c.b16 %v454, %v452
    %v565 = vpack.c.b16 %v457, %v455
    %v566 = vpack.c.b16 %v458, %v456
    %v567 = vpack.c.b16 %v461, %v459
    %v568 = vpack.c.b16 %v462, %v460
    %v569 = vpack.c.b16 %v465, %v463
    %v570 = vpack.c.b16 %v466, %v464
    %v571 = vpack.c.b16 %v469, %v467
    %v572 = vpack.c.b16 %v470, %v468
    %v573 = vpack.c.b16 %v473, %v471
    %v574 = vpack.c.b16 %v474, %v472
    %v575 = vpack.c.b16 %v477, %v475
    %v576 = vpack.c.b16 %v478, %v476
    %vm675 = vcmask 130048
    %v677 = vsel %vm675, %v74, 0
    %679 = vmatprep.subr.bf16.mxu0 %v480
    %680 = vmatpush1.bf16.msra.mxu0 %v479
    %681 = vmatprep.subr.bf16.mxu0 %v482
    %682 = vmatpush1.bf16.msra.mxu0 %v481
    %683 = vmatprep.subr.bf16.mxu0 %v484
    %684 = vmatpush1.bf16.msra.mxu0 %v483
    %685 = vmatprep.subr.bf16.mxu0 %v486
    %686 = vmatpush1.bf16.msra.mxu0 %v485
    %687 = vmatprep.subr.bf16.mxu0 %v488
    %688 = vmatpush1.bf16.msra.mxu0 %v487
    %689 = vmatprep.subr.bf16.mxu0 %v490
    %690 = vmatpush1.bf16.msra.mxu0 %v489
    %691 = vmatprep.subr.bf16.mxu0 %v492
    %692 = vmatpush1.bf16.msra.mxu0 %v491
    %693 = vmatprep.subr.bf16.mxu0 %v494
    %694 = vmatpush1.bf16.msra.mxu0 %v493
    %695 = vmatprep.subr.bf16.mxu0 %v496
    %696 = vmatpush1.bf16.msra.mxu0 %v495
    %697 = vmatprep.subr.bf16.mxu0 %v498
    %698 = vmatpush1.bf16.msra.mxu0 %v497
    %699 = vmatprep.subr.bf16.mxu0 %v500
    %700 = vmatpush1.bf16.msra.mxu0 %v499
    %701 = vmatprep.subr.bf16.mxu0 %v502
    %702 = vmatpush1.bf16.msra.mxu0 %v501
    %703 = vmatprep.subr.bf16.mxu0 %v504
    %704 = vmatpush1.bf16.msra.mxu0 %v503
    %705 = vmatprep.subr.bf16.mxu0 %v506
    %706 = vmatpush1.bf16.msra.mxu0 %v505
    %707 = vmatprep.subr.bf16.mxu0 %v508
    %708 = vmatpush1.bf16.msra.mxu0 %v507
    %709 = vmatprep.subr.bf16.mxu0 %v510
    %710 = vmatpush1.bf16.msra.mxu0 %v509
    %711 = vmatprep.mubr.bf16.mxu0 %v69
    %712 = vmatmul.mubr.bf16.gmra.mrb[0].mxu0 %v68
    %v713 = vpop.f32.mrb[0].mxu0
    %v714 = vadd.f32 %v178, %v713
    %v715 = vpop.f32.mrb[0].mxu0
    %v716 = vadd.f32 %v182, %v715
    %v717 = vpop.f32.mrb[0].mxu0
    %v718 = vpop.f32.mrb[0].mxu0
    %719 = vdwg.mxu0
    %720 = vmatprep.subr.bf16.mxu0 %v512
    %721 = vmatpush1.bf16.msra.mxu0 %v511
    %722 = vmatprep.subr.bf16.mxu0 %v514
    %723 = vmatpush1.bf16.msra.mxu0 %v513
    %724 = vmatprep.subr.bf16.mxu0 %v516
    %725 = vmatpush1.bf16.msra.mxu0 %v515
    %726 = vmatprep.subr.bf16.mxu0 %v518
    %727 = vmatpush1.bf16.msra.mxu0 %v517
    %728 = vmatprep.subr.bf16.mxu0 %v520
    %729 = vmatpush1.bf16.msra.mxu0 %v519
    %730 = vmatprep.subr.bf16.mxu0 %v522
    %731 = vmatpush1.bf16.msra.mxu0 %v521
    %732 = vmatprep.subr.bf16.mxu0 %v524
    %733 = vmatpush1.bf16.msra.mxu0 %v523
    %734 = vmatprep.subr.bf16.mxu0 %v526
    %735 = vmatpush1.bf16.msra.mxu0 %v525
    %736 = vmatprep.subr.bf16.mxu0 %v528
    %737 = vmatpush1.bf16.msra.mxu0 %v527
    %738 = vmatprep.subr.bf16.mxu0 %v530
    %739 = vmatpush1.bf16.msra.mxu0 %v529
    %740 = vmatprep.subr.bf16.mxu0 %v532
    %741 = vmatpush1.bf16.msra.mxu0 %v531
    %742 = vmatprep.subr.bf16.mxu0 %v534
    %743 = vmatpush1.bf16.msra.mxu0 %v533
    %744 = vmatprep.subr.bf16.mxu0 %v536
    %745 = vmatpush1.bf16.msra.mxu0 %v535
    %746 = vmatprep.subr.bf16.mxu0 %v538
    %747 = vmatpush1.bf16.msra.mxu0 %v537
    %748 = vmatprep.subr.bf16.mxu0 %v540
    %749 = vmatpush1.bf16.msra.mxu0 %v539
    %750 = vmatprep.subr.bf16.mxu0 %v542
    %751 = vmatpush1.bf16.msra.mxu0 %v541
    %752 = vmatprep.mubr.bf16.mxu0 %v71
    %753 = vmatmul.mubr.bf16.gmra.mrb[0].mxu0 %v70
    %v754 = vpop.f32.mrb[0].mxu0
    %v755 = vadd.f32 %v714, %v754
    %v756 = vpop.f32.mrb[0].mxu0
    %v757 = vadd.f32 %v716, %v756
    %v758 = vpop.f32.mrb[0].mxu0
    %v759 = vpop.f32.mrb[0].mxu0
    %760 = vdwg.mxu0
    %761 = vmatprep.subr.bf16.mxu0 %v544
    %762 = vmatpush1.bf16.msra.mxu0 %v543
    %763 = vmatprep.subr.bf16.mxu0 %v546
    %764 = vmatpush1.bf16.msra.mxu0 %v545
    %765 = vmatprep.subr.bf16.mxu0 %v548
    %766 = vmatpush1.bf16.msra.mxu0 %v547
    %767 = vmatprep.subr.bf16.mxu0 %v550
    %768 = vmatpush1.bf16.msra.mxu0 %v549
    %769 = vmatprep.subr.bf16.mxu0 %v552
    %770 = vmatpush1.bf16.msra.mxu0 %v551
    %771 = vmatprep.subr.bf16.mxu0 %v554
    %772 = vmatpush1.bf16.msra.mxu0 %v553
    %773 = vmatprep.subr.bf16.mxu0 %v556
    %774 = vmatpush1.bf16.msra.mxu0 %v555
    %775 = vmatprep.subr.bf16.mxu0 %v558
    %776 = vmatpush1.bf16.msra.mxu0 %v557
    %777 = vmatprep.subr.bf16.mxu0 %v560
    %778 = vmatpush1.bf16.msra.mxu0 %v559
    %779 = vmatprep.subr.bf16.mxu0 %v562
    %780 = vmatpush1.bf16.msra.mxu0 %v561
    %781 = vmatprep.subr.bf16.mxu0 %v564
    %782 = vmatpush1.bf16.msra.mxu0 %v563
    %783 = vmatprep.subr.bf16.mxu0 %v566
    %784 = vmatpush1.bf16.msra.mxu0 %v565
    %785 = vmatprep.subr.bf16.mxu0 %v568
    %786 = vmatpush1.bf16.msra.mxu0 %v567
    %787 = vmatprep.subr.bf16.mxu0 %v570
    %788 = vmatpush1.bf16.msra.mxu0 %v569
    %789 = vmatprep.subr.bf16.mxu0 %v572
    %790 = vmatpush1.bf16.msra.mxu0 %v571
    %791 = vmatprep.subr.bf16.mxu0 %v574
    %792 = vmatpush1.bf16.msra.mxu0 %v573
    %793 = vmatprep.mubr.bf16.mxu0 %v73
    %794 = vmatmul.mubr.bf16.gmra.mrb[0].mxu0 %v72
    %v795 = vpop.f32.mrb[0].mxu0
    %v796 = vadd.f32 %v755, %v795
    %v797 = vpop.f32.mrb[0].mxu0
    %v798 = vadd.f32 %v757, %v797
    %v799 = vpop.f32.mrb[0].mxu0
    %v800 = vpop.f32.mrb[0].mxu0
    %801 = vdwg.mxu0
    %802 = vmatprep.subr.bf16.mxu0 %v576
    %803 = vmatpush1.bf16.msra.mxu0 %v575
    %804 = vmatprep.subr.bf16.mxu0 0
    %805 = vmatpush1.bf16.msra.mxu0 0
    %806 = vmatprep.subr.bf16.mxu0 0
    %807 = vmatpush1.bf16.msra.mxu0 0
    %808 = vmatprep.subr.bf16.mxu0 0
    %809 = vmatpush1.bf16.msra.mxu0 0
    %810 = vmatprep.subr.bf16.mxu0 0
    %811 = vmatpush1.bf16.msra.mxu0 0
    %812 = vmatprep.subr.bf16.mxu0 0
    %813 = vmatpush1.bf16.msra.mxu0 0
    %814 = vmatprep.subr.bf16.mxu0 0
    %815 = vmatpush1.bf16.msra.mxu0 0
    %816 = vmatprep.subr.bf16.mxu0 0
    %817 = vmatpush1.bf16.msra.mxu0 0
    %818 = vmatprep.subr.bf16.mxu0 0
    %819 = vmatpush1.bf16.msra.mxu0 0
    %820 = vmatprep.subr.bf16.mxu0 0
    %821 = vmatpush1.bf16.msra.mxu0 0
    %822 = vmatprep.subr.bf16.mxu0 0
    %823 = vmatpush1.bf16.msra.mxu0 0
    %824 = vmatprep.subr.bf16.mxu0 0
    %825 = vmatpush1.bf16.msra.mxu0 0
    %826 = vmatprep.subr.bf16.mxu0 0
    %827 = vmatpush1.bf16.msra.mxu0 0
    %828 = vmatprep.subr.bf16.mxu0 0
    %829 = vmatpush1.bf16.msra.mxu0 0
    %830 = vmatprep.subr.bf16.mxu0 0
    %831 = vmatpush1.bf16.msra.mxu0 0
    %832 = vmatprep.subr.bf16.mxu0 0
    %833 = vmatpush1.bf16.msra.mxu0 0
    %834 = vmatprep.mubr.bf16.mxu0 0
    %835 = vmatmul.mubr.bf16.gmra.mrb[0].mxu0 %v677
    %v836 = vpop.f32.mrb[0].mxu0
    %v837 = vadd.f32 %v796, %v836
    %v838 = vpop.f32.mrb[0].mxu0
    %v839 = vadd.f32 %v798, %v838
    %v840 = vpop.f32.mrb[0].mxu0
    %v841 = vpop.f32.mrb[0].mxu0
    %842 = vdwg.mxu0
    %v843 = vmul.f32 %v837, 0.5
    %v844 = vmul.f32 %v839, 0.5
    %v845 = vtanh.pop %v843
    %v846 = vtanh.pop %v844
    %v847 = vadd.f32 %v845, 1.0
    %v848 = vadd.f32 %v846, 1.0
    %v849 = vmul.f32 %v847, 0.5
    %v850 = vmul.f32 %v848, 0.5
    %v851 = vpack.c.bf16 %v849, %v849
    %v852 = vpack.c.bf16 %v850, %v850
    %v853 = vld [vmem:[#allocation7] sm:$0xf]
    %v854 = vld [vmem:[#allocation7 + $0x4] sm:$0xf]
    %v855 = vld [vmem:[#allocation7 + $0x8] sm:$0xf]
    %v856 = vld [vmem:[#allocation7 + $0xc] sm:$0xf]
    %v857 = vld [vmem:[#allocation7 + $0x10] sm:$0xf]
    %v858 = vld [vmem:[#allocation7 + $0x14] sm:$0xf]
    %v859 = vld [vmem:[#allocation7 + $0x18] sm:$0xf]
    %v860 = vld [vmem:[#allocation7 + $0x1c] sm:$0xf]
    %v861 = vld [vmem:[#allocation7 + $0x20] sm:$0xf]
    %v862 = vld [vmem:[#allocation7 + $0x24] sm:$0xf]
    %v863 = vld [vmem:[#allocation7 + $0x28] sm:$0xf]
    %v864 = vld [vmem:[#allocation7 + $0x2c] sm:$0xf]
    %v865 = vld [vmem:[#allocation7 + $0x30] sm:$0xf]
    %v866 = vld [vmem:[#allocation7 + $0x34] sm:$0xf]
    %v867 = vld [vmem:[#allocation7 + $0x38] sm:$0xf]
    %v868 = vld [vmem:[#allocation7 + $0x3c] sm:$0xf]
    %v869 = vld [vmem:[#allocation7 + $0x40] sm:$0xf]
    %v870 = vld [vmem:[#allocation7 + $0x44] sm:$0xf]
    %v871 = vld [vmem:[#allocation7 + $0x48] sm:$0xf]
    %v872 = vld [vmem:[#allocation7 + $0x4c] sm:$0xf]
    %v873 = vld [vmem:[#allocation7 + $0x50] sm:$0xf]
    %v874 = vld [vmem:[#allocation7 + $0x54] sm:$0xf]
    %v875 = vld [vmem:[#allocation7 + $0x58] sm:$0xf]
    %v876 = vld [vmem:[#allocation7 + $0x5c] sm:$0xf]
    %v877 = vld [vmem:[#allocation7 + $0x60] sm:$0xf]
    %v878 = vld [vmem:[#allocation7 + $0x64] sm:$0xf]
    %v879 = vld [vmem:[#allocation7 + $0x68] sm:$0xf]
    %v880 = vld [vmem:[#allocation7 + $0x6c] sm:$0xf]
    %v881 = vld [vmem:[#allocation7 + $0x70] sm:$0xf]
    %v882 = vld [vmem:[#allocation7 + $0x74] sm:$0xf]
    %v883 = vld [vmem:[#allocation7 + $0x78] sm:$0xf]
    %v884 = vld [vmem:[#allocation7 + $0x7c] sm:$0xf]
    %v885 = vld [vmem:[%s4] sm:$0x1]
    %v887 = vlaneseq
    %v888 = vshrl.u32 %v887, 7
    %v889 = vsub.s32 0, %v888
    %v890 = vrot.slane %v885, %v889
    %v924 = vunpack.c.l.b16 %v853
    %v925 = vunpack.c.l.b16 %v854
    %v926 = vunpack.c.l.b16 %v855
    %v927 = vunpack.c.l.b16 %v856
    %v928 = vunpack.c.l.b16 %v857
    %v929 = vunpack.c.l.b16 %v858
    %v930 = vunpack.c.l.b16 %v859
    %v931 = vunpack.c.l.b16 %v860
    %v932 = vunpack.c.l.b16 %v861
    %v933 = vunpack.c.l.b16 %v862
    %v934 = vunpack.c.l.b16 %v863
    %v935 = vunpack.c.l.b16 %v864
    %v936 = vunpack.c.l.b16 %v865
    %v937 = vunpack.c.l.b16 %v866
    %v938 = vunpack.c.l.b16 %v867
    %v939 = vunpack.c.l.b16 %v868
    %v940 = vunpack.c.l.b16 %v869
    %v941 = vunpack.c.l.b16 %v870
    %v942 = vunpack.c.l.b16 %v871
    %v943 = vunpack.c.l.b16 %v872
    %v944 = vunpack.c.l.b16 %v873
    %v945 = vunpack.c.l.b16 %v874
    %v946 = vunpack.c.l.b16 %v875
    %v947 = vunpack.c.l.b16 %v876
    %v948 = vunpack.c.l.b16 %v877
    %v949 = vunpack.c.l.b16 %v878
    %v950 = vunpack.c.l.b16 %v879
    %v951 = vunpack.c.l.b16 %v880
    %v952 = vunpack.c.l.b16 %v881
    %v953 = vunpack.c.l.b16 %v882
    %v954 = vunpack.c.l.b16 %v883
    %v955 = vunpack.c.l.b16 %v884
    %v956 = vpack.c.b16 %v925, %v924
    %v957 = vpack.c.b16 %v927, %v926
    %v958 = vpack.c.b16 %v929, %v928
    %v959 = vpack.c.b16 %v931, %v930
    %v960 = vpack.c.b16 %v933, %v932
    %v961 = vpack.c.b16 %v935, %v934
    %v962 = vpack.c.b16 %v937, %v936
    %v963 = vpack.c.b16 %v939, %v938
    %v964 = vpack.c.b16 %v941, %v940
    %v965 = vpack.c.b16 %v943, %v942
    %v966 = vpack.c.b16 %v945, %v944
    %v967 = vpack.c.b16 %v947, %v946
    %v968 = vpack.c.b16 %v949, %v948
    %v969 = vpack.c.b16 %v951, %v950
    %v970 = vpack.c.b16 %v953, %v952
    %v971 = vpack.c.b16 %v955, %v954
    %988 = vmatprep.subr.bf16.mxu0 0
    %989 = vmatpush1.bf16.msra.mxu0 %v956
    %990 = vmatprep.subr.bf16.mxu0 0
    %991 = vmatpush1.bf16.msra.mxu0 %v957
    %992 = vmatprep.subr.bf16.mxu0 0
    %993 = vmatpush1.bf16.msra.mxu0 %v958
    %994 = vmatprep.subr.bf16.mxu0 0
    %995 = vmatpush1.bf16.msra.mxu0 %v959
    %996 = vmatprep.subr.bf16.mxu0 0
    %997 = vmatpush1.bf16.msra.mxu0 %v960
    %998 = vmatprep.subr.bf16.mxu0 0
    %999 = vmatpush1.bf16.msra.mxu0 %v961
    %1000 = vmatprep.subr.bf16.mxu0 0
    %1001 = vmatpush1.bf16.msra.mxu0 %v962
    %1002 = vmatprep.subr.bf16.mxu0 0
    %1003 = vmatpush1.bf16.msra.mxu0 %v963
    %1004 = vmatprep.subr.bf16.mxu0 0
    %1005 = vmatpush1.bf16.msra.mxu0 %v964
    %1006 = vmatprep.subr.bf16.mxu0 0
    %1007 = vmatpush1.bf16.msra.mxu0 %v965
    %1008 = vmatprep.subr.bf16.mxu0 0
    %1009 = vmatpush1.bf16.msra.mxu0 %v966
    %1010 = vmatprep.subr.bf16.mxu0 0
    %1011 = vmatpush1.bf16.msra.mxu0 %v967
    %1012 = vmatprep.subr.bf16.mxu0 0
    %1013 = vmatpush1.bf16.msra.mxu0 %v968
    %1014 = vmatprep.subr.bf16.mxu0 0
    %1015 = vmatpush1.bf16.msra.mxu0 %v969
    %1016 = vmatprep.subr.bf16.mxu0 0
    %1017 = vmatpush1.bf16.msra.mxu0 %v970
    %1018 = vmatprep.subr.bf16.mxu0 0
    %1019 = vmatpush1.bf16.msra.mxu0 %v971
    %1020 = vmatprep.mubr.bf16.mxu0 %v852
    %1021 = vmatmul.mubr.bf16.gmra.mrb[0].mxu0 %v851
    %v1022 = vpop.f32.mrb[0].mxu0
    %v1023 = vadd.f32 %v890, %v1022
    %v1024 = vpop.f32.mrb[0].mxu0
    %v1025 = vpop.f32.mrb[0].mxu0
    %v1026 = vpop.f32.mrb[0].mxu0
    %1027 = vdwg.mxu0
    %1028 = vmax.xlane.f32.xlu0 %v1023
    %v1029 = vpop.xlane.xlu0 %1028
    %v1030 = vsub.f32 %v1023, %v1029
    %v1031 = vmul.f32 %v1030, 1.442695
    %v1032 = vpow.pop %v1031
    %1033 = vadd.xlane.f32.xlu0 %v1032
    %v1034 = vpop.xlane.xlu0 %1033
    %v1035 = vrcp.pop %v1034
    %v1036 = vmul.f32 %v1032, %v1035
    %v1037 = vpack.c.bf16 %v1036, %v1036
    %1038 = vst [vmem:[#allocation8] sm:$0xf] %v1037
    // Predicated region
    $region34: #{tpu_custom_call.1} parent=1 // pred_check
      _
    $region35: #{tpu_custom_call.1} parent=1 // pred_check_branch
      %1040 = sbr.rel (0) target = $region37
    $region36: #{tpu_custom_call.1} parent=1 // pred_region
      %s1042 = ssub.s32 64, 64
      %1043 = vsyncadd [#allocation4], %s1042
      %s1045 = sshll.u32 [#allocation8], 4
      %s1046 = int_to_ptr.vmem [resolvable:$true] %s1045
      %1048 = dma.vmem_to_hbm [thread:$0]  %s1046, 64, %s5, [#allocation4]
    $region37: #{tpu_custom_call.1} parent=1 // pred_fallthru
      _
    // Predicated region
    $region38: #{tpu_custom_call.1} parent=1 // pred_check
      _
    $region39: #{tpu_custom_call.1} parent=1 // pred_check_branch
      %1050 = sbr.rel (0) target = $region41
    $region40: #{tpu_custom_call.1} parent=1 // pred_region
      %1051 = dma.done [#allocation4], 64
    $region41: #{tpu_custom_call.1} parent=1 // pred_fallthru
      _
    %1052 = vsyncpa [#allocation3], 1
    %1053 = vsyncpa [#allocation6], 1
    %1054 = vsyncpa [#allocation4], 1

</llo_original>
